<compile_context>
chip_gen: v5e
topology: v5e:2x2
jax: 0.10.0
libtpu: 0.0.40
codegen_flags: <defaults>
</compile_context>

<pallas_src>
import functools
import numpy as np
import jax
import jax.numpy as jnp
from jax.experimental import pallas as pl
from jax.experimental.pallas import tpu as pltpu


def _round_up(x, m):
    return ((x + m - 1) // m) * m


def _to_pair(v):
    return (v, v) if isinstance(v, int) else tuple(v)


@functools.lru_cache(maxsize=1)
def _tpu_caps():
    """Best-effort (mxu_n_is_256_wide, physical_vmem_bytes) for this TPU."""
    kind = ""
    try:
        kind = jax.devices()[0].device_kind.lower()
    except Exception:
        pass
    mxu_256 = ("v6" in kind) or ("v7" in kind)          # v6e/v7x: 256-wide MXU N
    vmem_cap = 64 * 2**20 if "v7" in kind else 128 * 2**20
    try:
        info = pltpu.get_tpu_info()
        vmem_cap = int(getattr(info, "vmem_capacity_bytes", vmem_cap))
    except Exception:
        pass
    return mxu_256, vmem_cap


# ----------------------------------------------------------------------------
# Pallas kernel: K-blocked (tm, tk) @ (tk, tn) on the MXU, f32 accumulation,
# bias fused and unpadded store on the last K step.
# ----------------------------------------------------------------------------
def _qconv_matmul_kernel(p_ref, w_ref, b_ref, o_ref, acc_ref):
    # Correctness note: partial edge blocks (M % tm != 0) read a few
    # out-of-range patch rows; that garbage only lands in accumulator rows the
    # masked edge-block store never writes back, so the visible output is
    # exact. Padded weight columns are real zeros.
    k = pl.program_id(2)

    @pl.when(k == 0)
    def _():
        acc_ref[...] = jnp.zeros_like(acc_ref)

    acc_ref[...] += jnp.dot(p_ref[...], w_ref[...],
                            preferred_element_type=jnp.float32)

    @pl.when(k == pl.num_programs(2) - 1)
    def _():
        n_out = o_ref.shape[-1]             # == tn, or Cout when Cout < tn
        acc = acc_ref[...]
        o_ref[...] = (acc[:, :n_out] + b_ref[...][:, :n_out]).astype(o_ref.dtype)


def _pallas_matmul_bias(patches, w_mat, bias, out_dtype, *, tm=1024, tk_max=2048):
    """(M, K) bf16 patches @ (K, Cout) weights + bias -> (M, Cout) out_dtype.

    Weights/bias are zero-padded up to a lane-dense weight tile; the output is
    written UNPADDED (no padded f32 store + slice pass). bf16 MXU operands,
    f32 VMEM accumulator. Tile sizes and the VMEM budget are chosen per TPU
    generation.
    """
    M, K = patches.shape
    Cout = w_mat.shape[1]
    assert patches.dtype == jnp.bfloat16

    mxu_256, vmem_cap = _tpu_caps()

    # N tiling: 256-wide only where the MXU is 256-wide in N (v6e/v7x) and
    # Cout can fill it; v5e stays at 128 (128x128 MXU, scarcer store slots).
    tn = 256 if (mxu_256 and Cout >= 256) else 128
    Cp = _round_up(Cout, tn)               # weight/bias lane padding only
    out_bn = Cout if Cout < tn else tn     # output block width (unpadded out)

    # K tiling: single full-K block when it fits, otherwise 128-aligned tiles
    # chosen to minimize (usually eliminate) the K pad pass.
    if K <= tk_max:
        tk, Kp = K, K
    else:
        nk = -(-K // tk_max)
        tk = _round_up(-(-K // nk), 128)
        Kp = nk * tk
        if Kp != K:
            # TODO(synk): handle the ragged last K tile in-kernel instead of
            # padding (rarely hit; done in bf16 to halve the pad traffic).
            patches = jnp.pad(patches, ((0, 0), (0, Kp - K)))

    w_pad = jnp.zeros((Kp, Cp), jnp.bfloat16).at[:K, :Cout].set(
        w_mat.astype(jnp.bfloat16))
    b_pad = jnp.zeros((1, Cp), jnp.float32).at[0, :Cout].set(
        bias.astype(jnp.float32))

    # M tiling: large tiles so per-step pipeline overhead is amortized; the
    # edge M tile is handled by the pl.cdiv grid (masked store). Blocks never
    # exceed the array extent.
    tm = min(tm, (M // 8) * 8) if M >= 8 else M
    if M >= 1024:
        # keep gm >= 2 so both v7x TensorCores get work on the parallel M axis
        tm = min(tm, _round_up(-(-M // 2), 8))

    gm = pl.cdiv(M, tm)
    gn = Cp // tn
    gk = Kp // tk

    # Explicit VMEM budget: double-buffered tiles + f32 accumulator, capped
    # per generation (v7x: 64 MiB physical -> 48 MiB; v5e/v6e: up to 100 MiB).
    tile_bytes = (2 * tm * tk * 2 + 2 * tk * tn * 2 + 2 * tn * 4
                  + 2 * tm * out_bn * 4 + tm * tn * 4)
    vmem_budget = (48 << 20) if vmem_cap <= (64 << 20) else (100 << 20)
    vmem_limit = int(min(max(2 * tile_bytes, 16 << 20), vmem_budget))

    cost = pl.CostEstimate(
        flops=2 * M * Kp * Cp,
        transcendentals=0,
        bytes_accessed=(patches.size * 2 + w_pad.size * 2 + b_pad.size * 4
                        + M * Cout * 4),
    )

    return pl.pallas_call(
        _qconv_matmul_kernel,
        out_shape=jax.ShapeDtypeStruct((M, Cout), out_dtype),
        grid_spec=pltpu.PrefetchScalarGridSpec(
            num_scalar_prefetch=0,
            grid=(gm, gn, gk),
            in_specs=[
                # NOTE: if profiling still shows exposed input DMA, add
                # pipeline_mode=pl.Buffered(3) on this (streamed) operand.
                pl.BlockSpec((tm, tk), lambda i, j, k: (i, k)),
                pl.BlockSpec((tk, tn), lambda i, j, k: (k, j)),
                pl.BlockSpec((1, tn), lambda i, j, k: (0, j)),
            ],
            out_specs=pl.BlockSpec((tm, out_bn), lambda i, j, k: (i, j)),
            scratch_shapes=[pltpu.VMEM((tm, tn), jnp.float32)],
        ),
        compiler_params=pltpu.CompilerParams(
            dimension_semantics=("parallel", "parallel", "arbitrary"),
            vmem_limit_bytes=vmem_limit,
        ),
        cost_estimate=cost,
    )(patches, w_pad, b_pad)


# ----------------------------------------------------------------------------
# Quaternion conv forward (matches quaternion_conv + F.conv2d semantics)
# ----------------------------------------------------------------------------
def quaternion_conv2d(x, r_w, i_w, j_w, k_w, bias, stride=1, padding=0, dilation=1):
    # Assemble the full quaternion weight matrix exactly like quaternion_conv().
    row_r = jnp.concatenate([r_w, -i_w, -j_w, -k_w], axis=1)
    row_i = jnp.concatenate([i_w,  r_w, -k_w,  j_w], axis=1)
    row_j = jnp.concatenate([j_w,  k_w,  r_w, -i_w], axis=1)
    row_k = jnp.concatenate([k_w, -j_w,  i_w,  r_w], axis=1)
    W = jnp.concatenate([row_r, row_i, row_j, row_k], axis=0)  # (Cout, Cin, KH, KW)

    N, Cin, H, Wd = x.shape
    Cout, _, KH, KW = W.shape
    sh, sw = _to_pair(stride)
    ph, pw = _to_pair(padding)
    dh, dw = _to_pair(dilation)

    OH = (H + 2 * ph - dh * (KH - 1) - 1) // sh + 1
    OW = (Wd + 2 * pw - dw * (KW - 1) - 1) // sw + 1

    # NHWC im2col built directly in bf16: channels on the lane axis, a single
    # bf16 materialization of the expanded patches (no f32 round trip).
    x_nhwc = jnp.transpose(x, (0, 2, 3, 1)).astype(jnp.bfloat16)
    x_pad = jnp.pad(x_nhwc, ((0, 0), (ph, ph), (pw, pw), (0, 0)))
    cols = []
    for ih in range(KH):
        for iw in range(KW):
            cols.append(x_pad[:, ih * dh: ih * dh + (OH - 1) * sh + 1: sh,
                                 iw * dw: iw * dw + (OW - 1) * sw + 1: sw, :])
    patches = jnp.concatenate(cols, axis=-1)                 # (N, OH, OW, KH*KW*Cin)
    patches = patches.reshape(N * OH * OW, KH * KW * Cin)    # (M, K) bf16

    # weight -> (K, Cout) with K ordered (kh, kw, cin), matching the patches
    w_mat = jnp.transpose(W, (2, 3, 1, 0)).reshape(KH * KW * Cin, Cout)

    out = _pallas_matmul_bias(patches, w_mat, bias, x.dtype)  # (M, Cout) unpadded

    # Module interface is NCHW; this single transpose of the small final
    # output is the only remaining layout pass.
    out = out.reshape(N, OH, OW, Cout)
    return jnp.transpose(out, (0, 3, 1, 2))


# ----------------------------------------------------------------------------
# Deterministic quaternion weight init (JAX re-implementation of quaternion_init)
# ----------------------------------------------------------------------------
def quaternion_init_jax(key, in_q, out_q, kernel_size, criterion="glorot"):
    kh, kw = kernel_size
    receptive_field = kh * kw
    fan_in = in_q * receptive_field
    fan_out = out_q * receptive_field
    if criterion == "glorot":
        s = 1.0 / np.sqrt(2 * (fan_in + fan_out))
    else:
        s = 1.0 / np.sqrt(2 * fan_in)

    kshape = (out_q, in_q, kh, kw)
    k1, k2, k3, k4, k5 = jax.random.split(key, 5)
    # chi(4) r.v. == L2 norm of 4 iid standard normals, scaled by s
    g = jax.random.normal(k1, (4,) + kshape)
    modulus = s * jnp.sqrt(jnp.sum(g * g, axis=0))
    v_i = jax.random.uniform(k2, kshape, minval=-1.0, maxval=1.0)
    v_j = jax.random.uniform(k3, kshape, minval=-1.0, maxval=1.0)
    v_k = jax.random.uniform(k4, kshape, minval=-1.0, maxval=1.0)
    norm = jnp.sqrt(v_i ** 2 + v_j ** 2 + v_k ** 2) + 1e-4
    v_i, v_j, v_k = v_i / norm, v_j / norm, v_k / norm
    phase = jax.random.uniform(k5, kshape, minval=-np.pi, maxval=np.pi)

    w_r = modulus * jnp.cos(phase)
    w_i = modulus * v_i * jnp.sin(phase)
    w_j = modulus * v_j * jnp.sin(phase)
    w_k = modulus * v_k * jnp.sin(phase)
    return w_r, w_i, w_j, w_k


# ----------------------------------------------------------------------------
if __name__ == "__main__":
    # QConv2d(in_channels=8, out_channels=8, kernel_size=3, stride=1, padding=1)
    in_channels, out_channels = 8, 8
    kernel_size = (3, 3)
    stride, padding, dilation = 1, 1, 1
    in_q, out_q = in_channels // 4, out_channels // 4

    key = jax.random.PRNGKey(0)
    k_x, k_w = jax.random.split(key)

    x = jax.random.normal(k_x, (2, in_channels, 16, 16), dtype=jnp.float32)  # NCHW

    r_w, i_w, j_w, k_w_ = quaternion_init_jax(k_w, in_q, out_q, kernel_size)
    bias = jnp.zeros((out_channels,), dtype=jnp.float32)  # reset_parameters zeros bias

    fwd = jax.jit(functools.partial(quaternion_conv2d, stride=stride,
                                    padding=padding, dilation=dilation))
    out = jax.block_until_ready(fwd(x, r_w, i_w, j_w, k_w_, bias))

    # Cross-check against a pure-JAX reference convolution on bf16-rounded
    # operands (the kernel intentionally runs the MXU in bf16 with f32 accum).
    row_r = jnp.concatenate([r_w, -i_w, -j_w, -k_w_], axis=1)
    row_i = jnp.concatenate([i_w,  r_w, -k_w_,  j_w], axis=1)
    row_j = jnp.concatenate([j_w,  k_w_,  r_w, -i_w], axis=1)
    row_k = jnp.concatenate([k_w_, -j_w,  i_w,  r_w], axis=1)
    W_full = jnp.concatenate([row_r, row_i, row_j, row_k], axis=0)
    x_q = x.astype(jnp.bfloat16).astype(jnp.float32)
    W_q = W_full.astype(jnp.bfloat16).astype(jnp.float32)
    ref = jax.lax.conv_general_dilated(
        x_q, W_q, window_strides=(stride, stride),
        padding=[(padding, padding), (padding, padding)],
        rhs_dilation=(dilation, dilation),
        dimension_numbers=("NCHW", "OIHW", "NCHW"),
        precision=jax.lax.Precision.HIGHEST,
    ) + bias[None, :, None, None]

    assert out.shape == (2, out_channels, 16, 16), out.shape
    np.testing.assert_allclose(np.asarray(out), np.asarray(ref), rtol=2e-2, atol=2e-2)

    print("KERNEL_OK")
</pallas_src>

<mosaic_0001>
module attributes {stable_mosaic.version = 11 : i64} {
  func.func @_qconv_matmul_kernel(%arg0: i32, %arg1: i32, %arg2: i32, %arg3: memref<512x72xbf16, #tpu.memory_space<vmem>>, %arg4: memref<72x128xbf16, #tpu.memory_space<vmem>>, %arg5: memref<1x128xf32, #tpu.memory_space<vmem>>, %arg6: memref<512x8xf32, #tpu.memory_space<vmem>>, %arg7: memref<512x128xf32, #tpu.memory_space<vmem>>) attributes {dimension_semantics = [#tpu.dimension_semantics<parallel>, #tpu.dimension_semantics<parallel>, #tpu.dimension_semantics<arbitrary>], iteration_bounds = array<i64: 1, 1, 1>, scalar_prefetch = 0 : i64, scratch_operands = 1 : i64, tpu.core_type = #tpu.core_type<tc>, window_params = [{transform_indices = @transform_0, window_bounds = array<i64: 512, 72>}, {transform_indices = @transform_1, window_bounds = array<i64: 72, 128>}, {transform_indices = @transform_2, window_bounds = array<i64: 1, 128>}, {transform_indices = @transform_3, window_bounds = array<i64: 512, 8>}]} {
    %c0_i32 = arith.constant 0 : i32
    %0 = arith.cmpi eq, %arg2, %c0_i32 : i32
    %1 = arith.extui %0 : i1 to i32
    %c0_i32_0 = arith.constant 0 : i32
    %2 = arith.cmpi ne, %1, %c0_i32_0 : i32
    scf.if %2 {
      %cst_10 = arith.constant 0.000000e+00 : f32
      %12 = vector.broadcast %cst_10 : f32 to vector<512x128xf32>
      %c0_11 = arith.constant 0 : index
      %c0_12 = arith.constant 0 : index
      %13 = vector.load %arg7[%c0_11, %c0_12] : memref<512x128xf32, #tpu.memory_space<vmem>>, vector<512x128xf32>
      tpu.vector_store %arg7[%c0_11, %c0_12], %12 {strides = array<i32>} : memref<512x128xf32, #tpu.memory_space<vmem>>, vector<512x128xf32>,
    } else {
    }
    %c0 = arith.constant 0 : index
    %c0_1 = arith.constant 0 : index
    %3 = vector.load %arg7[%c0, %c0_1] : memref<512x128xf32, #tpu.memory_space<vmem>>, vector<512x128xf32>
    %c0_2 = arith.constant 0 : index
    %c0_3 = arith.constant 0 : index
    %4 = vector.load %arg3[%c0_2, %c0_3] : memref<512x72xbf16, #tpu.memory_space<vmem>>, vector<512x72xbf16>
    %c0_4 = arith.constant 0 : index
    %c0_5 = arith.constant 0 : index
    %5 = vector.load %arg4[%c0_4, %c0_5] : memref<72x128xbf16, #tpu.memory_space<vmem>>, vector<72x128xbf16>
    %cst = arith.constant dense<0.000000e+00> : vector<512x128xf32>
    %6 = tpu.matmul %4, %5, %cst {dimension_numbers = #tpu.dot_dimension_numbers<[1], [0], [0], [1], [0, 0, 1, 1], [], []>} : vector<512x72xbf16>, vector<72x128xbf16>, vector<512x128xf32> -> vector<512x128xf32>
    %7 = arith.addf %3, %6 : vector<512x128xf32>
    %c0_6 = arith.constant 0 : index
    %c0_7 = arith.constant 0 : index
    %8 = vector.load %arg7[%c0_6, %c0_7] : memref<512x128xf32, #tpu.memory_space<vmem>>, vector<512x128xf32>
    tpu.vector_store %arg7[%c0_6, %c0_7], %7 {strides = array<i32>} : memref<512x128xf32, #tpu.memory_space<vmem>>, vector<512x128xf32>,
    %c0_i32_8 = arith.constant 0 : i32
    %9 = arith.cmpi eq, %arg2, %c0_i32_8 : i32
    %10 = arith.extui %9 : i1 to i32
    %c0_i32_9 = arith.constant 0 : i32
    %11 = arith.cmpi ne, %10, %c0_i32_9 : i32
    scf.if %11 {
      %c0_10 = arith.constant 0 : index
      %c0_11 = arith.constant 0 : index
      %12 = vector.load %arg7[%c0_10, %c0_11] : memref<512x128xf32, #tpu.memory_space<vmem>>, vector<512x128xf32>
      %13 = vector.extract_strided_slice %12 {offsets = [0, 0], sizes = [512, 8], strides = [1, 1]} : vector<512x128xf32> to vector<512x8xf32>
      %c0_12 = arith.constant 0 : index
      %c0_13 = arith.constant 0 : index
      %14 = vector.load %arg5[%c0_12, %c0_13] : memref<1x128xf32, #tpu.memory_space<vmem>>, vector<1x128xf32>
      %15 = vector.extract_strided_slice %14 {offsets = [0, 0], sizes = [1, 8], strides = [1, 1]} : vector<1x128xf32> to vector<1x8xf32>
      %16 = vector.broadcast %15 : vector<1x8xf32> to vector<512x8xf32>
      %17 = arith.addf %13, %16 : vector<512x8xf32>
      %c0_14 = arith.constant 0 : index
      %c0_15 = arith.constant 0 : index
      %18 = vector.load %arg6[%c0_14, %c0_15] : memref<512x8xf32, #tpu.memory_space<vmem>>, vector<512x8xf32>
      tpu.vector_store %arg6[%c0_14, %c0_15], %17 {strides = array<i32>} : memref<512x8xf32, #tpu.memory_space<vmem>>, vector<512x8xf32>,
    } else {
    }
    return
  }
  func.func @transform_0(%arg0: i32, %arg1: i32, %arg2: i32) -> (i32, i32) {
    %c0_i32 = arith.constant 0 : i32
    return %arg0, %arg2 : i32, i32
  }
  func.func @transform_1(%arg0: i32, %arg1: i32, %arg2: i32) -> (i32, i32) {
    %c0_i32 = arith.constant 0 : i32
    return %arg2, %arg1 : i32, i32
  }
  func.func @transform_2(%arg0: i32, %arg1: i32, %arg2: i32) -> (i32, i32) {
    %c0_i32 = arith.constant 0 : i32
    %c0_i32_0 = arith.constant 0 : i32
    return %c0_i32, %arg1 : i32, i32
  }
  func.func @transform_3(%arg0: i32, %arg1: i32, %arg2: i32) -> (i32, i32) {
    %c0_i32 = arith.constant 0 : i32
    return %arg0, %arg1 : i32, i32
  }
}

</mosaic_0001>

<llo_original>
// kernel: quaternion_conv2d.1
$region0: #{quaternion_conv2d.1}
  #allocation0 [shape = 'u32[]', space=smem, size = 0x4, offset = 0x4, fixed_abs, tag = 'smem constant byte address 0x4 - core index']
  #allocation1 [shape = 'u32[72,128]{1,0:T(1,128)}', space=vmem, size = 0x9000, scoped, tag = 'internal scratch']
  #allocation2 [shape = 'f32[512,128]{1,0:T(8,128)}', space=vmem, size = 0x40000, scoped, tag = 'scratch operand']
  %s0 = inlined_call_operand.vmem [shape: bf16[512,72], index: 0, kind: input, shape index: {}]
  %s1 = inlined_call_operand.vmem [shape: bf16[72,128], index: 1, kind: input, shape index: {}]
  %s2 = inlined_call_operand.vmem [shape: f32[1,128], index: 2, kind: input, shape index: {}]
  %s3 = inlined_call_operand.vmem [shape: f32[512,8], index: 3, kind: output, shape index: {}]
  %s4 = sld [smem:[#allocation0]]
  $region30: #{quaternion_conv2d.1} parent=0
    _
  %s6 = ssub.s32 1, %s4
  %s7 = scalar_select 0, %s6, %s4
  // Predicated region
  $region2: #{quaternion_conv2d.1} parent=0 // pred_check
    _
  $region3: #{quaternion_conv2d.1} parent=0 // pred_check_branch
    %9 = sbr.rel (0) target = $region5
  $region4: #{quaternion_conv2d.1} parent=0 // pred_region
    _
  $region5: #{quaternion_conv2d.1} parent=0 // pred_fallthru
    _
  // Predicated region
  $region6: #{quaternion_conv2d.1} parent=0 // pred_check
    _
  $region7: #{quaternion_conv2d.1} parent=0 // pred_check_branch
    %11 = sbr.rel (0) target = $region9
  $region8: #{quaternion_conv2d.1} parent=0 // pred_region
    _
  $region9: #{quaternion_conv2d.1} parent=0 // pred_fallthru
    _
  // Predicated region
  $region10: #{quaternion_conv2d.1} parent=0 // pred_check
    _
  $region11: #{quaternion_conv2d.1} parent=0 // pred_check_branch
    %13 = sbr.rel (0) target = $region13
  $region12: #{quaternion_conv2d.1} parent=0 // pred_region
    _
  $region13: #{quaternion_conv2d.1} parent=0 // pred_fallthru
    _
  %p15 = scmp.eq.s32.totalorder 0, 0
  // Predicated region
  $region14: #{quaternion_conv2d.1} parent=0 // pred_check
    %p16 = pneg %p15
  $region15: #{quaternion_conv2d.1} parent=0 // pred_check_branch
    %18 = sbr.rel (%p16) target = $region17
  $region16: #{quaternion_conv2d.1} parent=0 // pred_region
    %19 = vst [vmem:[#allocation2] sm:$0xff] 0.0
    %20 = vst [vmem:[#allocation2 + $0x8] sm:$0xff] 0.0
    %21 = vst [vmem:[#allocation2 + $0x10] sm:$0xff] 0.0
    %22 = vst [vmem:[#allocation2 + $0x18] sm:$0xff] 0.0
    %23 = vst [vmem:[#allocation2 + $0x20] sm:$0xff] 0.0
    %24 = vst [vmem:[#allocation2 + $0x28] sm:$0xff] 0.0
    %25 = vst [vmem:[#allocation2 + $0x30] sm:$0xff] 0.0
    %26 = vst [vmem:[#allocation2 + $0x38] sm:$0xff] 0.0
    %27 = vst [vmem:[#allocation2 + $0x40] sm:$0xff] 0.0
    %28 = vst [vmem:[#allocation2 + $0x48] sm:$0xff] 0.0
    %29 = vst [vmem:[#allocation2 + $0x50] sm:$0xff] 0.0
    %30 = vst [vmem:[#allocation2 + $0x58] sm:$0xff] 0.0
    %31 = vst [vmem:[#allocation2 + $0x60] sm:$0xff] 0.0
    %32 = vst [vmem:[#allocation2 + $0x68] sm:$0xff] 0.0
    %33 = vst [vmem:[#allocation2 + $0x70] sm:$0xff] 0.0
    %34 = vst [vmem:[#allocation2 + $0x78] sm:$0xff] 0.0
    %35 = vst [vmem:[#allocation2 + $0x80] sm:$0xff] 0.0
    %36 = vst [vmem:[#allocation2 + $0x88] sm:$0xff] 0.0
    %37 = vst [vmem:[#allocation2 + $0x90] sm:$0xff] 0.0
    %38 = vst [vmem:[#allocation2 + $0x98] sm:$0xff] 0.0
    %39 = vst [vmem:[#allocation2 + $0xa0] sm:$0xff] 0.0
    %40 = vst [vmem:[#allocation2 + $0xa8] sm:$0xff] 0.0
    %41 = vst [vmem:[#allocation2 + $0xb0] sm:$0xff] 0.0
    %42 = vst [vmem:[#allocation2 + $0xb8] sm:$0xff] 0.0
    %43 = vst [vmem:[#allocation2 + $0xc0] sm:$0xff] 0.0
    %44 = vst [vmem:[#allocation2 + $0xc8] sm:$0xff] 0.0
    %45 = vst [vmem:[#allocation2 + $0xd0] sm:$0xff] 0.0
    %46 = vst [vmem:[#allocation2 + $0xd8] sm:$0xff] 0.0
    %47 = vst [vmem:[#allocation2 + $0xe0] sm:$0xff] 0.0
    %48 = vst [vmem:[#allocation2 + $0xe8] sm:$0xff] 0.0
    %49 = vst [vmem:[#allocation2 + $0xf0] sm:$0xff] 0.0
    %50 = vst [vmem:[#allocation2 + $0xf8] sm:$0xff] 0.0
    %51 = vst [vmem:[#allocation2 + $0x100] sm:$0xff] 0.0
    %52 = vst [vmem:[#allocation2 + $0x108] sm:$0xff] 0.0
    %53 = vst [vmem:[#allocation2 + $0x110] sm:$0xff] 0.0
    %54 = vst [vmem:[#allocation2 + $0x118] sm:$0xff] 0.0
    %55 = vst [vmem:[#allocation2 + $0x120] sm:$0xff] 0.0
    %56 = vst [vmem:[#allocation2 + $0x128] sm:$0xff] 0.0
    %57 = vst [vmem:[#allocation2 + $0x130] sm:$0xff] 0.0
    %58 = vst [vmem:[#allocation2 + $0x138] sm:$0xff] 0.0
    %59 = vst [vmem:[#allocation2 + $0x140] sm:$0xff] 0.0
    %60 = vst [vmem:[#allocation2 + $0x148] sm:$0xff] 0.0
    %61 = vst [vmem:[#allocation2 + $0x150] sm:$0xff] 0.0
    %62 = vst [vmem:[#allocation2 + $0x158] sm:$0xff] 0.0
    %63 = vst [vmem:[#allocation2 + $0x160] sm:$0xff] 0.0
    %64 = vst [vmem:[#allocation2 + $0x168] sm:$0xff] 0.0
    %65 = vst [vmem:[#allocation2 + $0x170] sm:$0xff] 0.0
    %66 = vst [vmem:[#allocation2 + $0x178] sm:$0xff] 0.0
    %67 = vst [vmem:[#allocation2 + $0x180] sm:$0xff] 0.0
    %68 = vst [vmem:[#allocation2 + $0x188] sm:$0xff] 0.0
    %69 = vst [vmem:[#allocation2 + $0x190] sm:$0xff] 0.0
    %70 = vst [vmem:[#allocation2 + $0x198] sm:$0xff] 0.0
    %71 = vst [vmem:[#allocation2 + $0x1a0] sm:$0xff] 0.0
    %72 = vst [vmem:[#allocation2 + $0x1a8] sm:$0xff] 0.0
    %73 = vst [vmem:[#allocation2 + $0x1b0] sm:$0xff] 0.0
    %74 = vst [vmem:[#allocation2 + $0x1b8] sm:$0xff] 0.0
    %75 = vst [vmem:[#allocation2 + $0x1c0] sm:$0xff] 0.0
    %76 = vst [vmem:[#allocation2 + $0x1c8] sm:$0xff] 0.0
    %77 = vst [vmem:[#allocation2 + $0x1d0] sm:$0xff] 0.0
    %78 = vst [vmem:[#allocation2 + $0x1d8] sm:$0xff] 0.0
    %79 = vst [vmem:[#allocation2 + $0x1e0] sm:$0xff] 0.0
    %80 = vst [vmem:[#allocation2 + $0x1e8] sm:$0xff] 0.0
    %81 = vst [vmem:[#allocation2 + $0x1f0] sm:$0xff] 0.0
    %82 = vst [vmem:[#allocation2 + $0x1f8] sm:$0xff] 0.0
  $region17: #{quaternion_conv2d.1} parent=0 // pred_fallthru
    _
  %v83 = vld [vmem:[#allocation2] sm:$0xff]
  %v84 = vld [vmem:[#allocation2 + $0x8] sm:$0xff]
  %v85 = vld [vmem:[#allocation2 + $0x10] sm:$0xff]
  %v86 = vld [vmem:[#allocation2 + $0x18] sm:$0xff]
  %v87 = vld [vmem:[#allocation2 + $0x20] sm:$0xff]
  %v88 = vld [vmem:[#allocation2 + $0x28] sm:$0xff]
  %v89 = vld [vmem:[#allocation2 + $0x30] sm:$0xff]
  %v90 = vld [vmem:[#allocation2 + $0x38] sm:$0xff]
  %v91 = vld [vmem:[#allocation2 + $0x40] sm:$0xff]
  %v92 = vld [vmem:[#allocation2 + $0x48] sm:$0xff]
  %v93 = vld [vmem:[#allocation2 + $0x50] sm:$0xff]
  %v94 = vld [vmem:[#allocation2 + $0x58] sm:$0xff]
  %v95 = vld [vmem:[#allocation2 + $0x60] sm:$0xff]
  %v96 = vld [vmem:[#allocation2 + $0x68] sm:$0xff]
  %v97 = vld [vmem:[#allocation2 + $0x70] sm:$0xff]
  %v98 = vld [vmem:[#allocation2 + $0x78] sm:$0xff]
  %v99 = vld [vmem:[#allocation2 + $0x80] sm:$0xff]
  %v100 = vld [vmem:[#allocation2 + $0x88] sm:$0xff]
  %v101 = vld [vmem:[#allocation2 + $0x90] sm:$0xff]
  %v102 = vld [vmem:[#allocation2 + $0x98] sm:$0xff]
  %v103 = vld [vmem:[#allocation2 + $0xa0] sm:$0xff]
  %v104 = vld [vmem:[#allocation2 + $0xa8] sm:$0xff]
  %v105 = vld [vmem:[#allocation2 + $0xb0] sm:$0xff]
  %v106 = vld [vmem:[#allocation2 + $0xb8] sm:$0xff]
  %v107 = vld [vmem:[#allocation2 + $0xc0] sm:$0xff]
  %v108 = vld [vmem:[#allocation2 + $0xc8] sm:$0xff]
  %v109 = vld [vmem:[#allocation2 + $0xd0] sm:$0xff]
  %v110 = vld [vmem:[#allocation2 + $0xd8] sm:$0xff]
  %v111 = vld [vmem:[#allocation2 + $0xe0] sm:$0xff]
  %v112 = vld [vmem:[#allocation2 + $0xe8] sm:$0xff]
  %v113 = vld [vmem:[#allocation2 + $0xf0] sm:$0xff]
  %v114 = vld [vmem:[#allocation2 + $0xf8] sm:$0xff]
  %v115 = vld [vmem:[#allocation2 + $0x100] sm:$0xff]
  %v116 = vld [vmem:[#allocation2 + $0x108] sm:$0xff]
  %v117 = vld [vmem:[#allocation2 + $0x110] sm:$0xff]
  %v118 = vld [vmem:[#allocation2 + $0x118] sm:$0xff]
  %v119 = vld [vmem:[#allocation2 + $0x120] sm:$0xff]
  %v120 = vld [vmem:[#allocation2 + $0x128] sm:$0xff]
  %v121 = vld [vmem:[#allocation2 + $0x130] sm:$0xff]
  %v122 = vld [vmem:[#allocation2 + $0x138] sm:$0xff]
  %v123 = vld [vmem:[#allocation2 + $0x140] sm:$0xff]
  %v124 = vld [vmem:[#allocation2 + $0x148] sm:$0xff]
  %v125 = vld [vmem:[#allocation2 + $0x150] sm:$0xff]
  %v126 = vld [vmem:[#allocation2 + $0x158] sm:$0xff]
  %v127 = vld [vmem:[#allocation2 + $0x160] sm:$0xff]
  %v128 = vld [vmem:[#allocation2 + $0x168] sm:$0xff]
  %v129 = vld [vmem:[#allocation2 + $0x170] sm:$0xff]
  %v130 = vld [vmem:[#allocation2 + $0x178] sm:$0xff]
  %v131 = vld [vmem:[#allocation2 + $0x180] sm:$0xff]
  %v132 = vld [vmem:[#allocation2 + $0x188] sm:$0xff]
  %v133 = vld [vmem:[#allocation2 + $0x190] sm:$0xff]
  %v134 = vld [vmem:[#allocation2 + $0x198] sm:$0xff]
  %v135 = vld [vmem:[#allocation2 + $0x1a0] sm:$0xff]
  %v136 = vld [vmem:[#allocation2 + $0x1a8] sm:$0xff]
  %v137 = vld [vmem:[#allocation2 + $0x1b0] sm:$0xff]
  %v138 = vld [vmem:[#allocation2 + $0x1b8] sm:$0xff]
  %v139 = vld [vmem:[#allocation2 + $0x1c0] sm:$0xff]
  %v140 = vld [vmem:[#allocation2 + $0x1c8] sm:$0xff]
  %v141 = vld [vmem:[#allocation2 + $0x1d0] sm:$0xff]
  %v142 = vld [vmem:[#allocation2 + $0x1d8] sm:$0xff]
  %v143 = vld [vmem:[#allocation2 + $0x1e0] sm:$0xff]
  %v144 = vld [vmem:[#allocation2 + $0x1e8] sm:$0xff]
  %v145 = vld [vmem:[#allocation2 + $0x1f0] sm:$0xff]
  %v146 = vld [vmem:[#allocation2 + $0x1f8] sm:$0xff]
  %v147 = vld [vmem:[%s0] sm:$0xf]
  %v148 = vld [vmem:[%s0 + $0x4] sm:$0xf]
  %v149 = vld [vmem:[%s0 + $0x8] sm:$0xf]
  %v150 = vld [vmem:[%s0 + $0xc] sm:$0xf]
  %v151 = vld [vmem:[%s0 + $0x10] sm:$0xf]
  %v152 = vld [vmem:[%s0 + $0x14] sm:$0xf]
  %v153 = vld [vmem:[%s0 + $0x18] sm:$0xf]
  %v154 = vld [vmem:[%s0 + $0x1c] sm:$0xf]
  %v155 = vld [vmem:[%s0 + $0x20] sm:$0xf]
  %v156 = vld [vmem:[%s0 + $0x24] sm:$0xf]
  %v157 = vld [vmem:[%s0 + $0x28] sm:$0xf]
  %v158 = vld [vmem:[%s0 + $0x2c] sm:$0xf]
  %v159 = vld [vmem:[%s0 + $0x30] sm:$0xf]
  %v160 = vld [vmem:[%s0 + $0x34] sm:$0xf]
  %v161 = vld [vmem:[%s0 + $0x38] sm:$0xf]
  %v162 = vld [vmem:[%s0 + $0x3c] sm:$0xf]
  %v163 = vld [vmem:[%s0 + $0x40] sm:$0xf]
  %v164 = vld [vmem:[%s0 + $0x44] sm:$0xf]
  %v165 = vld [vmem:[%s0 + $0x48] sm:$0xf]
  %v166 = vld [vmem:[%s0 + $0x4c] sm:$0xf]
  %v167 = vld [vmem:[%s0 + $0x50] sm:$0xf]
  %v168 = vld [vmem:[%s0 + $0x54] sm:$0xf]
  %v169 = vld [vmem:[%s0 + $0x58] sm:$0xf]
  %v170 = vld [vmem:[%s0 + $0x5c] sm:$0xf]
  %v171 = vld [vmem:[%s0 + $0x60] sm:$0xf]
  %v172 = vld [vmem:[%s0 + $0x64] sm:$0xf]
  %v173 = vld [vmem:[%s0 + $0x68] sm:$0xf]
  %v174 = vld [vmem:[%s0 + $0x6c] sm:$0xf]
  %v175 = vld [vmem:[%s0 + $0x70] sm:$0xf]
  %v176 = vld [vmem:[%s0 + $0x74] sm:$0xf]
  %v177 = vld [vmem:[%s0 + $0x78] sm:$0xf]
  %v178 = vld [vmem:[%s0 + $0x7c] sm:$0xf]
  %v179 = vld [vmem:[%s0 + $0x80] sm:$0xf]
  %v180 = vld [vmem:[%s0 + $0x84] sm:$0xf]
  %v181 = vld [vmem:[%s0 + $0x88] sm:$0xf]
  %v182 = vld [vmem:[%s0 + $0x8c] sm:$0xf]
  %v183 = vld [vmem:[%s0 + $0x90] sm:$0xf]
  %v184 = vld [vmem:[%s0 + $0x94] sm:$0xf]
  %v185 = vld [vmem:[%s0 + $0x98] sm:$0xf]
  %v186 = vld [vmem:[%s0 + $0x9c] sm:$0xf]
  %v187 = vld [vmem:[%s0 + $0xa0] sm:$0xf]
  %v188 = vld [vmem:[%s0 + $0xa4] sm:$0xf]
  %v189 = vld [vmem:[%s0 + $0xa8] sm:$0xf]
  %v190 = vld [vmem:[%s0 + $0xac] sm:$0xf]
  %v191 = vld [vmem:[%s0 + $0xb0] sm:$0xf]
  %v192 = vld [vmem:[%s0 + $0xb4] sm:$0xf]
  %v193 = vld [vmem:[%s0 + $0xb8] sm:$0xf]
  %v194 = vld [vmem:[%s0 + $0xbc] sm:$0xf]
  %v195 = vld [vmem:[%s0 + $0xc0] sm:$0xf]
  %v196 = vld [vmem:[%s0 + $0xc4] sm:$0xf]
  %v197 = vld [vmem:[%s0 + $0xc8] sm:$0xf]
  %v198 = vld [vmem:[%s0 + $0xcc] sm:$0xf]
  %v199 = vld [vmem:[%s0 + $0xd0] sm:$0xf]
  %v200 = vld [vmem:[%s0 + $0xd4] sm:$0xf]
  %v201 = vld [vmem:[%s0 + $0xd8] sm:$0xf]
  %v202 = vld [vmem:[%s0 + $0xdc] sm:$0xf]
  %v203 = vld [vmem:[%s0 + $0xe0] sm:$0xf]
  %v204 = vld [vmem:[%s0 + $0xe4] sm:$0xf]
  %v205 = vld [vmem:[%s0 + $0xe8] sm:$0xf]
  %v206 = vld [vmem:[%s0 + $0xec] sm:$0xf]
  %v207 = vld [vmem:[%s0 + $0xf0] sm:$0xf]
  %v208 = vld [vmem:[%s0 + $0xf4] sm:$0xf]
  %v209 = vld [vmem:[%s0 + $0xf8] sm:$0xf]
  %v210 = vld [vmem:[%s0 + $0xfc] sm:$0xf]
  %v211 = vld [vmem:[%s1] sm:$0xf]
  %v212 = vld [vmem:[%s1 + $0x4] sm:$0xf]
  %v213 = vld [vmem:[%s1 + $0x8] sm:$0xf]
  %v214 = vld [vmem:[%s1 + $0xc] sm:$0xf]
  %v215 = vld [vmem:[%s1 + $0x10] sm:$0xf]
  %v216 = vld [vmem:[%s1 + $0x14] sm:$0xf]
  %v217 = vld [vmem:[%s1 + $0x18] sm:$0xf]
  %v218 = vld [vmem:[%s1 + $0x1c] sm:$0xf]
  %v219 = vld [vmem:[%s1 + $0x20] sm:$0xf]
  %v284 = vunpack.c.l.b16 %v147
  %v285 = vunpack.c.l.b16 %v148
  %v286 = vunpack.c.l.b16 %v149
  %v287 = vunpack.c.l.b16 %v150
  %v288 = vunpack.c.l.b16 %v151
  %v289 = vunpack.c.l.b16 %v152
  %v290 = vunpack.c.l.b16 %v153
  %v291 = vunpack.c.l.b16 %v154
  %v292 = vunpack.c.l.b16 %v155
  %v293 = vunpack.c.l.b16 %v156
  %v294 = vunpack.c.l.b16 %v157
  %v295 = vunpack.c.l.b16 %v158
  %v296 = vunpack.c.l.b16 %v159
  %v297 = vunpack.c.l.b16 %v160
  %v298 = vunpack.c.l.b16 %v161
  %v299 = vunpack.c.l.b16 %v162
  %v300 = vunpack.c.l.b16 %v163
  %v301 = vunpack.c.l.b16 %v164
  %v302 = vunpack.c.l.b16 %v165
  %v303 = vunpack.c.l.b16 %v166
  %v304 = vunpack.c.l.b16 %v167
  %v305 = vunpack.c.l.b16 %v168
  %v306 = vunpack.c.l.b16 %v169
  %v307 = vunpack.c.l.b16 %v170
  %v308 = vunpack.c.l.b16 %v171
  %v309 = vunpack.c.l.b16 %v172
  %v310 = vunpack.c.l.b16 %v173
  %v311 = vunpack.c.l.b16 %v174
  %v312 = vunpack.c.l.b16 %v175
  %v313 = vunpack.c.l.b16 %v176
  %v314 = vunpack.c.l.b16 %v177
  %v315 = vunpack.c.l.b16 %v178
  %v316 = vunpack.c.l.b16 %v179
  %v317 = vunpack.c.l.b16 %v180
  %v318 = vunpack.c.l.b16 %v181
  %v319 = vunpack.c.l.b16 %v182
  %v320 = vunpack.c.l.b16 %v183
  %v321 = vunpack.c.l.b16 %v184
  %v322 = vunpack.c.l.b16 %v185
  %v323 = vunpack.c.l.b16 %v186
  %v324 = vunpack.c.l.b16 %v187
  %v325 = vunpack.c.l.b16 %v188
  %v326 = vunpack.c.l.b16 %v189
  %v327 = vunpack.c.l.b16 %v190
  %v328 = vunpack.c.l.b16 %v191
  %v329 = vunpack.c.l.b16 %v192
  %v330 = vunpack.c.l.b16 %v193
  %v331 = vunpack.c.l.b16 %v194
  %v332 = vunpack.c.l.b16 %v195
  %v333 = vunpack.c.l.b16 %v196
  %v334 = vunpack.c.l.b16 %v197
  %v335 = vunpack.c.l.b16 %v198
  %v336 = vunpack.c.l.b16 %v199
  %v337 = vunpack.c.l.b16 %v200
  %v338 = vunpack.c.l.b16 %v201
  %v339 = vunpack.c.l.b16 %v202
  %v340 = vunpack.c.l.b16 %v203
  %v341 = vunpack.c.l.b16 %v204
  %v342 = vunpack.c.l.b16 %v205
  %v343 = vunpack.c.l.b16 %v206
  %v344 = vunpack.c.l.b16 %v207
  %v345 = vunpack.c.l.b16 %v208
  %v346 = vunpack.c.l.b16 %v209
  %v347 = vunpack.c.l.b16 %v210
  %v348 = vpack.c.b16 %v285, %v284
  %v349 = vpack.c.b16 %v287, %v286
  %v350 = vpack.c.b16 %v289, %v288
  %v351 = vpack.c.b16 %v291, %v290
  %v352 = vpack.c.b16 %v293, %v292
  %v353 = vpack.c.b16 %v295, %v294
  %v354 = vpack.c.b16 %v297, %v296
  %v355 = vpack.c.b16 %v299, %v298
  %v356 = vpack.c.b16 %v301, %v300
  %v357 = vpack.c.b16 %v303, %v302
  %v358 = vpack.c.b16 %v305, %v304
  %v359 = vpack.c.b16 %v307, %v306
  %v360 = vpack.c.b16 %v309, %v308
  %v361 = vpack.c.b16 %v311, %v310
  %v362 = vpack.c.b16 %v313, %v312
  %v363 = vpack.c.b16 %v315, %v314
  %v364 = vpack.c.b16 %v317, %v316
  %v365 = vpack.c.b16 %v319, %v318
  %v366 = vpack.c.b16 %v321, %v320
  %v367 = vpack.c.b16 %v323, %v322
  %v368 = vpack.c.b16 %v325, %v324
  %v369 = vpack.c.b16 %v327, %v326
  %v370 = vpack.c.b16 %v329, %v328
  %v371 = vpack.c.b16 %v331, %v330
  %v372 = vpack.c.b16 %v333, %v332
  %v373 = vpack.c.b16 %v335, %v334
  %v374 = vpack.c.b16 %v337, %v336
  %v375 = vpack.c.b16 %v339, %v338
  %v376 = vpack.c.b16 %v341, %v340
  %v377 = vpack.c.b16 %v343, %v342
  %v378 = vpack.c.b16 %v345, %v344
  %v379 = vpack.c.b16 %v347, %v346
  %v389 = vunpack.c.l.b16 %v211
  %v390 = vunpack.c.l.b16 %v212
  %v391 = vunpack.c.l.b16 %v213
  %v392 = vunpack.c.l.b16 %v214
  %v393 = vunpack.c.l.b16 %v215
  %v394 = vunpack.c.l.b16 %v216
  %v395 = vunpack.c.l.b16 %v217
  %v396 = vunpack.c.l.b16 %v218
  %v397 = vunpack.c.l.b16 %v219
  %v398 = vpack.c.b16 %v390, %v389
  %v399 = vpack.c.b16 %v392, %v391
  %v400 = vpack.c.b16 %v394, %v393
  %v401 = vpack.c.b16 %v396, %v395
  %v402 = vpack.c.b16 %v397, %v397
  %vm407 = vcmask 588800
  %v409 = vsel %vm407, %v348, 0
  %v412 = vsel %vm407, %v349, 0
  %v415 = vsel %vm407, %v350, 0
  %v418 = vsel %vm407, %v351, 0
  %v421 = vsel %vm407, %v352, 0
  %v424 = vsel %vm407, %v353, 0
  %v427 = vsel %vm407, %v354, 0
  %v430 = vsel %vm407, %v355, 0
  %v433 = vsel %vm407, %v356, 0
  %v436 = vsel %vm407, %v357, 0
  %v439 = vsel %vm407, %v358, 0
  %v442 = vsel %vm407, %v359, 0
  %v445 = vsel %vm407, %v360, 0
  %v448 = vsel %vm407, %v361, 0
  %v451 = vsel %vm407, %v362, 0
  %v454 = vsel %vm407, %v363, 0
  %v457 = vsel %vm407, %v364, 0
  %v460 = vsel %vm407, %v365, 0
  %v463 = vsel %vm407, %v366, 0
  %v466 = vsel %vm407, %v367, 0
  %v469 = vsel %vm407, %v368, 0
  %v472 = vsel %vm407, %v369, 0
  %v475 = vsel %vm407, %v370, 0
  %v478 = vsel %vm407, %v371, 0
  %v481 = vsel %vm407, %v372, 0
  %v484 = vsel %vm407, %v373, 0
  %v487 = vsel %vm407, %v374, 0
  %v490 = vsel %vm407, %v375, 0
  %v493 = vsel %vm407, %v376, 0
  %v496 = vsel %vm407, %v377, 0
  %v499 = vsel %vm407, %v378, 0
  %v502 = vsel %vm407, %v379, 0
  %vm504 = vcmask 1043456
  %v506 = vsel %vm504, %v402, 0
  %508 = vmatpush.bf16.msra.mxu0 0
  %509 = vmatpush.bf16.msra.mxu0 0
  %510 = vmatpush.bf16.msra.mxu0 0
  %511 = vmatpush.bf16.msra.mxu0 %v506
  %512 = vmatpush.bf16.msra.mxu0 %v401
  %513 = vmatpush.bf16.msra.mxu0 %v400
  %514 = vmatpush.bf16.msra.mxu0 %v399
  %515 = vmatpush.bf16.msra.mxu0 %v398
  %516 = vmatmul.bf16.gmra.mxu0 %v409
  %v517 = vpop.f32.mrf.mxu0
  %v518 = vadd.f32 0.0, %v517
  %v519 = vpop.f32.mrf.mxu0
  %v520 = vadd.f32 0.0, %v519
  %521 = vmatmul.bf16.gmra.mxu0 %v412
  %v522 = vpop.f32.mrf.mxu0
  %v523 = vadd.f32 0.0, %v522
  %v524 = vpop.f32.mrf.mxu0
  %v525 = vadd.f32 0.0, %v524
  %526 = vmatmul.bf16.gmra.mxu0 %v415
  %v527 = vpop.f32.mrf.mxu0
  %v528 = vadd.f32 0.0, %v527
  %v529 = vpop.f32.mrf.mxu0
  %v530 = vadd.f32 0.0, %v529
  %531 = vmatmul.bf16.gmra.mxu0 %v418
  %v532 = vpop.f32.mrf.mxu0
  %v533 = vadd.f32 0.0, %v532
  %v534 = vpop.f32.mrf.mxu0
  %v535 = vadd.f32 0.0, %v534
  %536 = vmatmul.bf16.gmra.mxu0 %v421
  %v537 = vpop.f32.mrf.mxu0
  %v538 = vadd.f32 0.0, %v537
  %v539 = vpop.f32.mrf.mxu0
  %v540 = vadd.f32 0.0, %v539
  %541 = vmatmul.bf16.gmra.mxu0 %v424
  %v542 = vpop.f32.mrf.mxu0
  %v543 = vadd.f32 0.0, %v542
  %v544 = vpop.f32.mrf.mxu0
  %v545 = vadd.f32 0.0, %v544
  %546 = vmatmul.bf16.gmra.mxu0 %v427
  %v547 = vpop.f32.mrf.mxu0
  %v548 = vadd.f32 0.0, %v547
  %v549 = vpop.f32.mrf.mxu0
  %v550 = vadd.f32 0.0, %v549
  %551 = vmatmul.bf16.gmra.mxu0 %v430
  %v552 = vpop.f32.mrf.mxu0
  %v553 = vadd.f32 0.0, %v552
  %v554 = vpop.f32.mrf.mxu0
  %v555 = vadd.f32 0.0, %v554
  %556 = vmatmul.bf16.gmra.mxu0 %v433
  %v557 = vpop.f32.mrf.mxu0
  %v558 = vadd.f32 0.0, %v557
  %v559 = vpop.f32.mrf.mxu0
  %v560 = vadd.f32 0.0, %v559
  %561 = vmatmul.bf16.gmra.mxu0 %v436
  %v562 = vpop.f32.mrf.mxu0
  %v563 = vadd.f32 0.0, %v562
  %v564 = vpop.f32.mrf.mxu0
  %v565 = vadd.f32 0.0, %v564
  %566 = vmatmul.bf16.gmra.mxu0 %v439
  %v567 = vpop.f32.mrf.mxu0
  %v568 = vadd.f32 0.0, %v567
  %v569 = vpop.f32.mrf.mxu0
  %v570 = vadd.f32 0.0, %v569
  %571 = vmatmul.bf16.gmra.mxu0 %v442
  %v572 = vpop.f32.mrf.mxu0
  %v573 = vadd.f32 0.0, %v572
  %v574 = vpop.f32.mrf.mxu0
  %v575 = vadd.f32 0.0, %v574
  %576 = vmatmul.bf16.gmra.mxu0 %v445
  %v577 = vpop.f32.mrf.mxu0
  %v578 = vadd.f32 0.0, %v577
  %v579 = vpop.f32.mrf.mxu0
  %v580 = vadd.f32 0.0, %v579
  %581 = vmatmul.bf16.gmra.mxu0 %v448
  %v582 = vpop.f32.mrf.mxu0
  %v583 = vadd.f32 0.0, %v582
  %v584 = vpop.f32.mrf.mxu0
  %v585 = vadd.f32 0.0, %v584
  %586 = vmatmul.bf16.gmra.mxu0 %v451
  %v587 = vpop.f32.mrf.mxu0
  %v588 = vadd.f32 0.0, %v587
  %v589 = vpop.f32.mrf.mxu0
  %v590 = vadd.f32 0.0, %v589
  %591 = vmatmul.bf16.gmra.mxu0 %v454
  %v592 = vpop.f32.mrf.mxu0
  %v593 = vadd.f32 0.0, %v592
  %v594 = vpop.f32.mrf.mxu0
  %v595 = vadd.f32 0.0, %v594
  %596 = vmatmul.bf16.gmra.mxu0 %v457
  %v597 = vpop.f32.mrf.mxu0
  %v598 = vadd.f32 0.0, %v597
  %v599 = vpop.f32.mrf.mxu0
  %v600 = vadd.f32 0.0, %v599
  %601 = vmatmul.bf16.gmra.mxu0 %v460
  %v602 = vpop.f32.mrf.mxu0
  %v603 = vadd.f32 0.0, %v602
  %v604 = vpop.f32.mrf.mxu0
  %v605 = vadd.f32 0.0, %v604
  %606 = vmatmul.bf16.gmra.mxu0 %v463
  %v607 = vpop.f32.mrf.mxu0
  %v608 = vadd.f32 0.0, %v607
  %v609 = vpop.f32.mrf.mxu0
  %v610 = vadd.f32 0.0, %v609
  %611 = vmatmul.bf16.gmra.mxu0 %v466
  %v612 = vpop.f32.mrf.mxu0
  %v613 = vadd.f32 0.0, %v612
  %v614 = vpop.f32.mrf.mxu0
  %v615 = vadd.f32 0.0, %v614
  %616 = vmatmul.bf16.gmra.mxu0 %v469
  %v617 = vpop.f32.mrf.mxu0
  %v618 = vadd.f32 0.0, %v617
  %v619 = vpop.f32.mrf.mxu0
  %v620 = vadd.f32 0.0, %v619
  %621 = vmatmul.bf16.gmra.mxu0 %v472
  %v622 = vpop.f32.mrf.mxu0
  %v623 = vadd.f32 0.0, %v622
  %v624 = vpop.f32.mrf.mxu0
  %v625 = vadd.f32 0.0, %v624
  %626 = vmatmul.bf16.gmra.mxu0 %v475
  %v627 = vpop.f32.mrf.mxu0
  %v628 = vadd.f32 0.0, %v627
  %v629 = vpop.f32.mrf.mxu0
  %v630 = vadd.f32 0.0, %v629
  %631 = vmatmul.bf16.gmra.mxu0 %v478
  %v632 = vpop.f32.mrf.mxu0
  %v633 = vadd.f32 0.0, %v632
  %v634 = vpop.f32.mrf.mxu0
  %v635 = vadd.f32 0.0, %v634
  %636 = vmatmul.bf16.gmra.mxu0 %v481
  %v637 = vpop.f32.mrf.mxu0
  %v638 = vadd.f32 0.0, %v637
  %v639 = vpop.f32.mrf.mxu0
  %v640 = vadd.f32 0.0, %v639
  %641 = vmatmul.bf16.gmra.mxu0 %v484
  %v642 = vpop.f32.mrf.mxu0
  %v643 = vadd.f32 0.0, %v642
  %v644 = vpop.f32.mrf.mxu0
  %v645 = vadd.f32 0.0, %v644
  %646 = vmatmul.bf16.gmra.mxu0 %v487
  %v647 = vpop.f32.mrf.mxu0
  %v648 = vadd.f32 0.0, %v647
  %v649 = vpop.f32.mrf.mxu0
  %v650 = vadd.f32 0.0, %v649
  %651 = vmatmul.bf16.gmra.mxu0 %v490
  %v652 = vpop.f32.mrf.mxu0
  %v653 = vadd.f32 0.0, %v652
  %v654 = vpop.f32.mrf.mxu0
  %v655 = vadd.f32 0.0, %v654
  %656 = vmatmul.bf16.gmra.mxu0 %v493
  %v657 = vpop.f32.mrf.mxu0
  %v658 = vadd.f32 0.0, %v657
  %v659 = vpop.f32.mrf.mxu0
  %v660 = vadd.f32 0.0, %v659
  %661 = vmatmul.bf16.gmra.mxu0 %v496
  %v662 = vpop.f32.mrf.mxu0
  %v663 = vadd.f32 0.0, %v662
  %v664 = vpop.f32.mrf.mxu0
  %v665 = vadd.f32 0.0, %v664
  %666 = vmatmul.bf16.gmra.mxu0 %v499
  %v667 = vpop.f32.mrf.mxu0
  %v668 = vadd.f32 0.0, %v667
  %v669 = vpop.f32.mrf.mxu0
  %v670 = vadd.f32 0.0, %v669
  %671 = vmatmul.bf16.gmra.mxu0 %v502
  %v672 = vpop.f32.mrf.mxu0
  %v673 = vadd.f32 0.0, %v672
  %v674 = vpop.f32.mrf.mxu0
  %v675 = vadd.f32 0.0, %v674
  %676 = vdwg.mxu0
  %v677 = vadd.f32 %v83, %v518
  %v678 = vadd.f32 %v84, %v520
  %v679 = vadd.f32 %v85, %v523
  %v680 = vadd.f32 %v86, %v525
  %v681 = vadd.f32 %v87, %v528
  %v682 = vadd.f32 %v88, %v530
  %v683 = vadd.f32 %v89, %v533
  %v684 = vadd.f32 %v90, %v535
  %v685 = vadd.f32 %v91, %v538
  %v686 = vadd.f32 %v92, %v540
  %v687 = vadd.f32 %v93, %v543
  %v688 = vadd.f32 %v94, %v545
  %v689 = vadd.f32 %v95, %v548
  %v690 = vadd.f32 %v96, %v550
  %v691 = vadd.f32 %v97, %v553
  %v692 = vadd.f32 %v98, %v555
  %v693 = vadd.f32 %v99, %v558
  %v694 = vadd.f32 %v100, %v560
  %v695 = vadd.f32 %v101, %v563
  %v696 = vadd.f32 %v102, %v565
  %v697 = vadd.f32 %v103, %v568
  %v698 = vadd.f32 %v104, %v570
  %v699 = vadd.f32 %v105, %v573
  %v700 = vadd.f32 %v106, %v575
  %v701 = vadd.f32 %v107, %v578
  %v702 = vadd.f32 %v108, %v580
  %v703 = vadd.f32 %v109, %v583
  %v704 = vadd.f32 %v110, %v585
  %v705 = vadd.f32 %v111, %v588
  %v706 = vadd.f32 %v112, %v590
  %v707 = vadd.f32 %v113, %v593
  %v708 = vadd.f32 %v114, %v595
  %v709 = vadd.f32 %v115, %v598
  %v710 = vadd.f32 %v116, %v600
  %v711 = vadd.f32 %v117, %v603
  %v712 = vadd.f32 %v118, %v605
  %v713 = vadd.f32 %v119, %v608
  %v714 = vadd.f32 %v120, %v610
  %v715 = vadd.f32 %v121, %v613
  %v716 = vadd.f32 %v122, %v615
  %v717 = vadd.f32 %v123, %v618
  %v718 = vadd.f32 %v124, %v620
  %v719 = vadd.f32 %v125, %v623
  %v720 = vadd.f32 %v126, %v625
  %v721 = vadd.f32 %v127, %v628
  %v722 = vadd.f32 %v128, %v630
  %v723 = vadd.f32 %v129, %v633
  %v724 = vadd.f32 %v130, %v635
  %v725 = vadd.f32 %v131, %v638
  %v726 = vadd.f32 %v132, %v640
  %v727 = vadd.f32 %v133, %v643
  %v728 = vadd.f32 %v134, %v645
  %v729 = vadd.f32 %v135, %v648
  %v730 = vadd.f32 %v136, %v650
  %v731 = vadd.f32 %v137, %v653
  %v732 = vadd.f32 %v138, %v655
  %v733 = vadd.f32 %v139, %v658
  %v734 = vadd.f32 %v140, %v660
  %v735 = vadd.f32 %v141, %v663
  %v736 = vadd.f32 %v142, %v665
  %v737 = vadd.f32 %v143, %v668
  %v738 = vadd.f32 %v144, %v670
  %v739 = vadd.f32 %v145, %v673
  %v740 = vadd.f32 %v146, %v675
  %741 = vst [vmem:[#allocation2] sm:$0xff] %v677
  %742 = vst [vmem:[#allocation2 + $0x8] sm:$0xff] %v678
  %743 = vst [vmem:[#allocation2 + $0x10] sm:$0xff] %v679
  %744 = vst [vmem:[#allocation2 + $0x18] sm:$0xff] %v680
  %745 = vst [vmem:[#allocation2 + $0x20] sm:$0xff] %v681
  %746 = vst [vmem:[#allocation2 + $0x28] sm:$0xff] %v682
  %747 = vst [vmem:[#allocation2 + $0x30] sm:$0xff] %v683
  %748 = vst [vmem:[#allocation2 + $0x38] sm:$0xff] %v684
  %749 = vst [vmem:[#allocation2 + $0x40] sm:$0xff] %v685
  %750 = vst [vmem:[#allocation2 + $0x48] sm:$0xff] %v686
  %751 = vst [vmem:[#allocation2 + $0x50] sm:$0xff] %v687
  %752 = vst [vmem:[#allocation2 + $0x58] sm:$0xff] %v688
  %753 = vst [vmem:[#allocation2 + $0x60] sm:$0xff] %v689
  %754 = vst [vmem:[#allocation2 + $0x68] sm:$0xff] %v690
  %755 = vst [vmem:[#allocation2 + $0x70] sm:$0xff] %v691
  %756 = vst [vmem:[#allocation2 + $0x78] sm:$0xff] %v692
  %757 = vst [vmem:[#allocation2 + $0x80] sm:$0xff] %v693
  %758 = vst [vmem:[#allocation2 + $0x88] sm:$0xff] %v694
  %759 = vst [vmem:[#allocation2 + $0x90] sm:$0xff] %v695
  %760 = vst [vmem:[#allocation2 + $0x98] sm:$0xff] %v696
  %761 = vst [vmem:[#allocation2 + $0xa0] sm:$0xff] %v697
  %762 = vst [vmem:[#allocation2 + $0xa8] sm:$0xff] %v698
  %763 = vst [vmem:[#allocation2 + $0xb0] sm:$0xff] %v699
  %764 = vst [vmem:[#allocation2 + $0xb8] sm:$0xff] %v700
  %765 = vst [vmem:[#allocation2 + $0xc0] sm:$0xff] %v701
  %766 = vst [vmem:[#allocation2 + $0xc8] sm:$0xff] %v702
  %767 = vst [vmem:[#allocation2 + $0xd0] sm:$0xff] %v703
  %768 = vst [vmem:[#allocation2 + $0xd8] sm:$0xff] %v704
  %769 = vst [vmem:[#allocation2 + $0xe0] sm:$0xff] %v705
  %770 = vst [vmem:[#allocation2 + $0xe8] sm:$0xff] %v706
  %771 = vst [vmem:[#allocation2 + $0xf0] sm:$0xff] %v707
  %772 = vst [vmem:[#allocation2 + $0xf8] sm:$0xff] %v708
  %773 = vst [vmem:[#allocation2 + $0x100] sm:$0xff] %v709
  %774 = vst [vmem:[#allocation2 + $0x108] sm:$0xff] %v710
  %775 = vst [vmem:[#allocation2 + $0x110] sm:$0xff] %v711
  %776 = vst [vmem:[#allocation2 + $0x118] sm:$0xff] %v712
  %777 = vst [vmem:[#allocation2 + $0x120] sm:$0xff] %v713
  %778 = vst [vmem:[#allocation2 + $0x128] sm:$0xff] %v714
  %779 = vst [vmem:[#allocation2 + $0x130] sm:$0xff] %v715
  %780 = vst [vmem:[#allocation2 + $0x138] sm:$0xff] %v716
  %781 = vst [vmem:[#allocation2 + $0x140] sm:$0xff] %v717
  %782 = vst [vmem:[#allocation2 + $0x148] sm:$0xff] %v718
  %783 = vst [vmem:[#allocation2 + $0x150] sm:$0xff] %v719
  %784 = vst [vmem:[#allocation2 + $0x158] sm:$0xff] %v720
  %785 = vst [vmem:[#allocation2 + $0x160] sm:$0xff] %v721
  %786 = vst [vmem:[#allocation2 + $0x168] sm:$0xff] %v722
  %787 = vst [vmem:[#allocation2 + $0x170] sm:$0xff] %v723
  %788 = vst [vmem:[#allocation2 + $0x178] sm:$0xff] %v724
  %789 = vst [vmem:[#allocation2 + $0x180] sm:$0xff] %v725
  %790 = vst [vmem:[#allocation2 + $0x188] sm:$0xff] %v726
  %791 = vst [vmem:[#allocation2 + $0x190] sm:$0xff] %v727
  %792 = vst [vmem:[#allocation2 + $0x198] sm:$0xff] %v728
  %793 = vst [vmem:[#allocation2 + $0x1a0] sm:$0xff] %v729
  %794 = vst [vmem:[#allocation2 + $0x1a8] sm:$0xff] %v730
  %795 = vst [vmem:[#allocation2 + $0x1b0] sm:$0xff] %v731
  %796 = vst [vmem:[#allocation2 + $0x1b8] sm:$0xff] %v732
  %797 = vst [vmem:[#allocation2 + $0x1c0] sm:$0xff] %v733
  %798 = vst [vmem:[#allocation2 + $0x1c8] sm:$0xff] %v734
  %799 = vst [vmem:[#allocation2 + $0x1d0] sm:$0xff] %v735
  %800 = vst [vmem:[#allocation2 + $0x1d8] sm:$0xff] %v736
  %801 = vst [vmem:[#allocation2 + $0x1e0] sm:$0xff] %v737
  %802 = vst [vmem:[#allocation2 + $0x1e8] sm:$0xff] %v738
  %803 = vst [vmem:[#allocation2 + $0x1f0] sm:$0xff] %v739
  %804 = vst [vmem:[#allocation2 + $0x1f8] sm:$0xff] %v740
  // Predicated region
  $region18: #{quaternion_conv2d.1} parent=0 // pred_check
    %p805 = pneg %p15
  $region19: #{quaternion_conv2d.1} parent=0 // pred_check_branch
    %807 = sbr.rel (%p805) target = $region21
  $region20: #{quaternion_conv2d.1} parent=0 // pred_region
    %v808 = vld [vmem:[#allocation2] sm:$0xff]
    %v809 = vld [vmem:[#allocation2 + $0x8] sm:$0xff]
    %v810 = vld [vmem:[#allocation2 + $0x10] sm:$0xff]
    %v811 = vld [vmem:[#allocation2 + $0x18] sm:$0xff]
    %v812 = vld [vmem:[#allocation2 + $0x20] sm:$0xff]
    %v813 = vld [vmem:[#allocation2 + $0x28] sm:$0xff]
    %v814 = vld [vmem:[#allocation2 + $0x30] sm:$0xff]
    %v815 = vld [vmem:[#allocation2 + $0x38] sm:$0xff]
    %v816 = vld [vmem:[#allocation2 + $0x40] sm:$0xff]
    %v817 = vld [vmem:[#allocation2 + $0x48] sm:$0xff]
    %v818 = vld [vmem:[#allocation2 + $0x50] sm:$0xff]
    %v819 = vld [vmem:[#allocation2 + $0x58] sm:$0xff]
    %v820 = vld [vmem:[#allocation2 + $0x60] sm:$0xff]
    %v821 = vld [vmem:[#allocation2 + $0x68] sm:$0xff]
    %v822 = vld [vmem:[#allocation2 + $0x70] sm:$0xff]
    %v823 = vld [vmem:[#allocation2 + $0x78] sm:$0xff]
    %v824 = vld [vmem:[#allocation2 + $0x80] sm:$0xff]
    %v825 = vld [vmem:[#allocation2 + $0x88] sm:$0xff]
    %v826 = vld [vmem:[#allocation2 + $0x90] sm:$0xff]
    %v827 = vld [vmem:[#allocation2 + $0x98] sm:$0xff]
    %v828 = vld [vmem:[#allocation2 + $0xa0] sm:$0xff]
    %v829 = vld [vmem:[#allocation2 + $0xa8] sm:$0xff]
    %v830 = vld [vmem:[#allocation2 + $0xb0] sm:$0xff]
    %v831 = vld [vmem:[#allocation2 + $0xb8] sm:$0xff]
    %v832 = vld [vmem:[#allocation2 + $0xc0] sm:$0xff]
    %v833 = vld [vmem:[#allocation2 + $0xc8] sm:$0xff]
    %v834 = vld [vmem:[#allocation2 + $0xd0] sm:$0xff]
    %v835 = vld [vmem:[#allocation2 + $0xd8] sm:$0xff]
    %v836 = vld [vmem:[#allocation2 + $0xe0] sm:$0xff]
    %v837 = vld [vmem:[#allocation2 + $0xe8] sm:$0xff]
    %v838 = vld [vmem:[#allocation2 + $0xf0] sm:$0xff]
    %v839 = vld [vmem:[#allocation2 + $0xf8] sm:$0xff]
    %v840 = vld [vmem:[#allocation2 + $0x100] sm:$0xff]
    %v841 = vld [vmem:[#allocation2 + $0x108] sm:$0xff]
    %v842 = vld [vmem:[#allocation2 + $0x110] sm:$0xff]
    %v843 = vld [vmem:[#allocation2 + $0x118] sm:$0xff]
    %v844 = vld [vmem:[#allocation2 + $0x120] sm:$0xff]
    %v845 = vld [vmem:[#allocation2 + $0x128] sm:$0xff]
    %v846 = vld [vmem:[#allocation2 + $0x130] sm:$0xff]
    %v847 = vld [vmem:[#allocation2 + $0x138] sm:$0xff]
    %v848 = vld [vmem:[#allocation2 + $0x140] sm:$0xff]
    %v849 = vld [vmem:[#allocation2 + $0x148] sm:$0xff]
    %v850 = vld [vmem:[#allocation2 + $0x150] sm:$0xff]
    %v851 = vld [vmem:[#allocation2 + $0x158] sm:$0xff]
    %v852 = vld [vmem:[#allocation2 + $0x160] sm:$0xff]
    %v853 = vld [vmem:[#allocation2 + $0x168] sm:$0xff]
    %v854 = vld [vmem:[#allocation2 + $0x170] sm:$0xff]
    %v855 = vld [vmem:[#allocation2 + $0x178] sm:$0xff]
    %v856 = vld [vmem:[#allocation2 + $0x180] sm:$0xff]
    %v857 = vld [vmem:[#allocation2 + $0x188] sm:$0xff]
    %v858 = vld [vmem:[#allocation2 + $0x190] sm:$0xff]
    %v859 = vld [vmem:[#allocation2 + $0x198] sm:$0xff]
    %v860 = vld [vmem:[#allocation2 + $0x1a0] sm:$0xff]
    %v861 = vld [vmem:[#allocation2 + $0x1a8] sm:$0xff]
    %v862 = vld [vmem:[#allocation2 + $0x1b0] sm:$0xff]
    %v863 = vld [vmem:[#allocation2 + $0x1b8] sm:$0xff]
    %v864 = vld [vmem:[#allocation2 + $0x1c0] sm:$0xff]
    %v865 = vld [vmem:[#allocation2 + $0x1c8] sm:$0xff]
    %v866 = vld [vmem:[#allocation2 + $0x1d0] sm:$0xff]
    %v867 = vld [vmem:[#allocation2 + $0x1d8] sm:$0xff]
    %v868 = vld [vmem:[#allocation2 + $0x1e0] sm:$0xff]
    %v869 = vld [vmem:[#allocation2 + $0x1e8] sm:$0xff]
    %v870 = vld [vmem:[#allocation2 + $0x1f0] sm:$0xff]
    %v871 = vld [vmem:[#allocation2 + $0x1f8] sm:$0xff]
    %v872 = vld [vmem:[%s2] sm:$0x1]
    %v874 = vperm.slane %v872, 0
    %v876 = vadd.f32 %v808, %v874
    %v877 = vadd.f32 %v809, %v874
    %v878 = vadd.f32 %v810, %v874
    %v879 = vadd.f32 %v811, %v874
    %v880 = vadd.f32 %v812, %v874
    %v881 = vadd.f32 %v813, %v874
    %v882 = vadd.f32 %v814, %v874
    %v883 = vadd.f32 %v815, %v874
    %v884 = vadd.f32 %v816, %v874
    %v885 = vadd.f32 %v817, %v874
    %v886 = vadd.f32 %v818, %v874
    %v887 = vadd.f32 %v819, %v874
    %v888 = vadd.f32 %v820, %v874
    %v889 = vadd.f32 %v821, %v874
    %v890 = vadd.f32 %v822, %v874
    %v891 = vadd.f32 %v823, %v874
    %v892 = vadd.f32 %v824, %v874
    %v893 = vadd.f32 %v825, %v874
    %v894 = vadd.f32 %v826, %v874
    %v895 = vadd.f32 %v827, %v874
    %v896 = vadd.f32 %v828, %v874
    %v897 = vadd.f32 %v829, %v874
    %v898 = vadd.f32 %v830, %v874
    %v899 = vadd.f32 %v831, %v874
    %v900 = vadd.f32 %v832, %v874
    %v901 = vadd.f32 %v833, %v874
    %v902 = vadd.f32 %v834, %v874
    %v903 = vadd.f32 %v835, %v874
    %v904 = vadd.f32 %v836, %v874
    %v905 = vadd.f32 %v837, %v874
    %v906 = vadd.f32 %v838, %v874
    %v907 = vadd.f32 %v839, %v874
    %v908 = vadd.f32 %v840, %v874
    %v909 = vadd.f32 %v841, %v874
    %v910 = vadd.f32 %v842, %v874
    %v911 = vadd.f32 %v843, %v874
    %v912 = vadd.f32 %v844, %v874
    %v913 = vadd.f32 %v845, %v874
    %v914 = vadd.f32 %v846, %v874
    %v915 = vadd.f32 %v847, %v874
    %v916 = vadd.f32 %v848, %v874
    %v917 = vadd.f32 %v849, %v874
    %v918 = vadd.f32 %v850, %v874
    %v919 = vadd.f32 %v851, %v874
    %v920 = vadd.f32 %v852, %v874
    %v921 = vadd.f32 %v853, %v874
    %v922 = vadd.f32 %v854, %v874
    %v923 = vadd.f32 %v855, %v874
    %v924 = vadd.f32 %v856, %v874
    %v925 = vadd.f32 %v857, %v874
    %v926 = vadd.f32 %v858, %v874
    %v927 = vadd.f32 %v859, %v874
    %v928 = vadd.f32 %v860, %v874
    %v929 = vadd.f32 %v861, %v874
    %v930 = vadd.f32 %v862, %v874
    %v931 = vadd.f32 %v863, %v874
    %v932 = vadd.f32 %v864, %v874
    %v933 = vadd.f32 %v865, %v874
    %v934 = vadd.f32 %v866, %v874
    %v935 = vadd.f32 %v867, %v874
    %v936 = vadd.f32 %v868, %v874
    %v937 = vadd.f32 %v869, %v874
    %v938 = vadd.f32 %v870, %v874
    %v939 = vadd.f32 %v871, %v874
    %vm940 = vcmask 64512
    %941 = vst.msk [vmem:[%s3] sm:$0xff] %vm940, %v876
    %942 = vst.msk [vmem:[%s3 + $0x8] sm:$0xff] %vm940, %v877
    %943 = vst.msk [vmem:[%s3 + $0x10] sm:$0xff] %vm940, %v878
    %944 = vst.msk [vmem:[%s3 + $0x18] sm:$0xff] %vm940, %v879
    %945 = vst.msk [vmem:[%s3 + $0x20] sm:$0xff] %vm940, %v880
    %946 = vst.msk [vmem:[%s3 + $0x28] sm:$0xff] %vm940, %v881
    %947 = vst.msk [vmem:[%s3 + $0x30] sm:$0xff] %vm940, %v882
    %948 = vst.msk [vmem:[%s3 + $0x38] sm:$0xff] %vm940, %v883
    %949 = vst.msk [vmem:[%s3 + $0x40] sm:$0xff] %vm940, %v884
    %950 = vst.msk [vmem:[%s3 + $0x48] sm:$0xff] %vm940, %v885
    %951 = vst.msk [vmem:[%s3 + $0x50] sm:$0xff] %vm940, %v886
    %952 = vst.msk [vmem:[%s3 + $0x58] sm:$0xff] %vm940, %v887
    %953 = vst.msk [vmem:[%s3 + $0x60] sm:$0xff] %vm940, %v888
    %954 = vst.msk [vmem:[%s3 + $0x68] sm:$0xff] %vm940, %v889
    %955 = vst.msk [vmem:[%s3 + $0x70] sm:$0xff] %vm940, %v890
    %956 = vst.msk [vmem:[%s3 + $0x78] sm:$0xff] %vm940, %v891
    %957 = vst.msk [vmem:[%s3 + $0x80] sm:$0xff] %vm940, %v892
    %958 = vst.msk [vmem:[%s3 + $0x88] sm:$0xff] %vm940, %v893
    %959 = vst.msk [vmem:[%s3 + $0x90] sm:$0xff] %vm940, %v894
    %960 = vst.msk [vmem:[%s3 + $0x98] sm:$0xff] %vm940, %v895
    %961 = vst.msk [vmem:[%s3 + $0xa0] sm:$0xff] %vm940, %v896
    %962 = vst.msk [vmem:[%s3 + $0xa8] sm:$0xff] %vm940, %v897
    %963 = vst.msk [vmem:[%s3 + $0xb0] sm:$0xff] %vm940, %v898
    %964 = vst.msk [vmem:[%s3 + $0xb8] sm:$0xff] %vm940, %v899
    %965 = vst.msk [vmem:[%s3 + $0xc0] sm:$0xff] %vm940, %v900
    %966 = vst.msk [vmem:[%s3 + $0xc8] sm:$0xff] %vm940, %v901
    %967 = vst.msk [vmem:[%s3 + $0xd0] sm:$0xff] %vm940, %v902
    %968 = vst.msk [vmem:[%s3 + $0xd8] sm:$0xff] %vm940, %v903
    %969 = vst.msk [vmem:[%s3 + $0xe0] sm:$0xff] %vm940, %v904
    %970 = vst.msk [vmem:[%s3 + $0xe8] sm:$0xff] %vm940, %v905
    %971 = vst.msk [vmem:[%s3 + $0xf0] sm:$0xff] %vm940, %v906
    %972 = vst.msk [vmem:[%s3 + $0xf8] sm:$0xff] %vm940, %v907
    %973 = vst.msk [vmem:[%s3 + $0x100] sm:$0xff] %vm940, %v908
    %974 = vst.msk [vmem:[%s3 + $0x108] sm:$0xff] %vm940, %v909
    %975 = vst.msk [vmem:[%s3 + $0x110] sm:$0xff] %vm940, %v910
    %976 = vst.msk [vmem:[%s3 + $0x118] sm:$0xff] %vm940, %v911
    %977 = vst.msk [vmem:[%s3 + $0x120] sm:$0xff] %vm940, %v912
    %978 = vst.msk [vmem:[%s3 + $0x128] sm:$0xff] %vm940, %v913
    %979 = vst.msk [vmem:[%s3 + $0x130] sm:$0xff] %vm940, %v914
    %980 = vst.msk [vmem:[%s3 + $0x138] sm:$0xff] %vm940, %v915
    %981 = vst.msk [vmem:[%s3 + $0x140] sm:$0xff] %vm940, %v916
    %982 = vst.msk [vmem:[%s3 + $0x148] sm:$0xff] %vm940, %v917
    %983 = vst.msk [vmem:[%s3 + $0x150] sm:$0xff] %vm940, %v918
    %984 = vst.msk [vmem:[%s3 + $0x158] sm:$0xff] %vm940, %v919
    %985 = vst.msk [vmem:[%s3 + $0x160] sm:$0xff] %vm940, %v920
    %986 = vst.msk [vmem:[%s3 + $0x168] sm:$0xff] %vm940, %v921
    %987 = vst.msk [vmem:[%s3 + $0x170] sm:$0xff] %vm940, %v922
    %988 = vst.msk [vmem:[%s3 + $0x178] sm:$0xff] %vm940, %v923
    %989 = vst.msk [vmem:[%s3 + $0x180] sm:$0xff] %vm940, %v924
    %990 = vst.msk [vmem:[%s3 + $0x188] sm:$0xff] %vm940, %v925
    %991 = vst.msk [vmem:[%s3 + $0x190] sm:$0xff] %vm940, %v926
    %992 = vst.msk [vmem:[%s3 + $0x198] sm:$0xff] %vm940, %v927
    %993 = vst.msk [vmem:[%s3 + $0x1a0] sm:$0xff] %vm940, %v928
    %994 = vst.msk [vmem:[%s3 + $0x1a8] sm:$0xff] %vm940, %v929
    %995 = vst.msk [vmem:[%s3 + $0x1b0] sm:$0xff] %vm940, %v930
    %996 = vst.msk [vmem:[%s3 + $0x1b8] sm:$0xff] %vm940, %v931
    %997 = vst.msk [vmem:[%s3 + $0x1c0] sm:$0xff] %vm940, %v932
    %998 = vst.msk [vmem:[%s3 + $0x1c8] sm:$0xff] %vm940, %v933
    %999 = vst.msk [vmem:[%s3 + $0x1d0] sm:$0xff] %vm940, %v934
    %1000 = vst.msk [vmem:[%s3 + $0x1d8] sm:$0xff] %vm940, %v935
    %1001 = vst.msk [vmem:[%s3 + $0x1e0] sm:$0xff] %vm940, %v936
    %1002 = vst.msk [vmem:[%s3 + $0x1e8] sm:$0xff] %vm940, %v937
    %1003 = vst.msk [vmem:[%s3 + $0x1f0] sm:$0xff] %vm940, %v938
    %1004 = vst.msk [vmem:[%s3 + $0x1f8] sm:$0xff] %vm940, %v939
  $region21: #{quaternion_conv2d.1} parent=0 // pred_fallthru
    _
  // Predicated region
  $region22: #{quaternion_conv2d.1} parent=0 // pred_check
    _
  $region23: #{quaternion_conv2d.1} parent=0 // pred_check_branch
    %1006 = sbr.rel (0) target = $region25
  $region24: #{quaternion_conv2d.1} parent=0 // pred_region
    _
  $region25: #{quaternion_conv2d.1} parent=0 // pred_fallthru
    _
  // Predicated region
  $region26: #{quaternion_conv2d.1} parent=0 // pred_check
    _
  $region27: #{quaternion_conv2d.1} parent=0 // pred_check_branch
    %1008 = sbr.rel (0) target = $region29
  $region28: #{quaternion_conv2d.1} parent=0 // pred_region
    _
  $region29: #{quaternion_conv2d.1} parent=0 // pred_fallthru
    _

</llo_original>
